<compile_context>
chip_gen: v7x
topology: tpu7x:2x2x1
jax: 0.10.0
libtpu: 0.0.40
codegen_flags: <defaults>
</compile_context>

<pallas_src>
import functools
import math

import jax
import jax.numpy as jnp
from jax import lax
from jax.experimental import pallas as pl
from jax.experimental.pallas import tpu as pltpu

BN_EPS = 1e-5


# --------------------------------------------------------------------------
# Pallas kernel 1: fused matmul (bf16 -> f32 acc) + BN scale/shift, bf16 out
# --------------------------------------------------------------------------
def _matmul_bn_kernel(x_ref, w_ref, s_ref, b_ref, o_ref):
    y = jnp.dot(x_ref[...], w_ref[...], preferred_element_type=jnp.float32)
    o_ref[...] = (y * s_ref[...] + b_ref[...]).astype(o_ref.dtype)


def _pick_row_tile(m, cap=512):
    """Row tile for the matmul kernel.

    Returns (tm, pad_rows).  Prefers a 16-multiple divisor of m (bf16 sublane
    packing, no pad copy), caps the tile at m//2 when m is large enough so the
    grid has >=2 parallel steps (v7x megacore), and pads M to a tile multiple
    when no clean divisor exists (instead of one huge full-M block).
    """
    cap = min(cap, m)
    if m >= 256:
        cap = min(cap, max(16, m // 2))       # guarantee >=2 grid steps
    best = None
    for t in range(16, cap + 1, 16):
        if m % t == 0:
            best = t
    if best is not None:
        return best, 0
    tm = min(256, max(16, ((cap // 16) * 16) or 16))
    pad = (-m) % tm
    return tm, pad


def _mm_compiler_params(tm, k, n):
    # double-buffered bf16 inputs + bf16 output tile + scale/shift (+ slack)
    est = 2 * (tm * k * 2 + k * n * 2 + tm * n * 2 + 2 * n * 4) + (2 << 20)
    kw = dict(dimension_semantics=("parallel",))
    if est > 16 * 1024 * 1024:        # raise scoped VMEM limit only when needed
        kw["vmem_limit_bytes"] = int(min(est, 48 * 1024 * 1024))  # v7x headroom
    return pltpu.CompilerParams(**kw)


def matmul_bn(x, w, scale, shift):
    """(M,K) @ (K,N) with fused per-channel BN scale/shift; tiles over M."""
    m, k = x.shape
    k2, n = w.shape
    assert k == k2
    tm, pad = _pick_row_tile(m)
    xb = x.astype(jnp.bfloat16)
    if pad:
        xb = jnp.pad(xb, ((0, pad), (0, 0)))
    mp = m + pad
    out = pl.pallas_call(
        _matmul_bn_kernel,
        out_shape=jax.ShapeDtypeStruct((mp, n), jnp.bfloat16),
        grid=(mp // tm,),
        in_specs=[
            pl.BlockSpec((tm, k), lambda i: (i, 0)),
            pl.BlockSpec((k, n), lambda i: (0, 0)),
            pl.BlockSpec((1, n), lambda i: (0, 0)),
            pl.BlockSpec((1, n), lambda i: (0, 0)),
        ],
        out_specs=pl.BlockSpec((tm, n), lambda i: (i, 0)),
        compiler_params=_mm_compiler_params(tm, k, n),
    )(xb, w.astype(jnp.bfloat16),
      scale.reshape(1, n).astype(jnp.float32),
      shift.reshape(1, n).astype(jnp.float32))
    return out[:m] if pad else out


# --------------------------------------------------------------------------
# Pallas kernel 2: direct (grouped) KxK conv + BN, no im2col, bf16 out
# --------------------------------------------------------------------------
def _conv_bn_kernel(x_ref, w_ref, s_ref, b_ref, o_ref, *, KH, KW, Ho, Wo, sh, sw):
    # x_ref: (Hp, Wp, Cin) bf16, one image resident in VMEM
    # w_ref: (KH*KW, Cin, Nout) bf16 (block-diagonal across groups)
    Cin = x_ref.shape[-1]
    Nout = o_ref.shape[-1]

    def row_body(ho, carry):
        h0 = ho * sh                                 # direct strided output row
        acc = jnp.zeros((Wo, Nout), jnp.float32)
        for kh in range(KH):
            for kw in range(KW):
                if sw == 1:
                    patch = x_ref[pl.ds(h0 + kh, 1), pl.ds(kw, Wo), :]
                else:
                    patch = x_ref[pl.ds(h0 + kh, 1), pl.ds(kw, Wo, stride=sw), :]
                acc = acc + jnp.dot(patch.reshape(Wo, Cin), w_ref[kh * KW + kw],
                                    preferred_element_type=jnp.float32)
        y = acc * s_ref[0, :] + b_ref[0, :]
        o_ref[pl.ds(ho, 1), :, :] = y.reshape(1, Wo, Nout).astype(o_ref.dtype)
        return carry

    unroll = True if Ho * KH * KW <= 96 else max(1, 96 // (KH * KW))
    lax.fori_loop(0, Ho, row_body, 0, unroll=unroll)


def _blockdiag_taps(w, groups):
    """torch (out_c, icg, KH, KW) weight -> (KH*KW, groups*icg, out_c) per-tap
    matrices, block-diagonal across groups (fuses all groups into one matmul
    whose store is lane-dense over the full out_c)."""
    out_c, icg, KH, KW = w.shape
    wt = jnp.transpose(w, (2, 3, 1, 0)).reshape(KH * KW, icg, out_c)
    if groups == 1:
        return wt
    cin = groups * icg
    ocg = out_c // groups
    full = jnp.zeros((KH * KW, cin, out_c), w.dtype)
    for g in range(groups):
        full = full.at[:, g * icg:(g + 1) * icg, g * ocg:(g + 1) * ocg].set(
            wt[:, :, g * ocg:(g + 1) * ocg])
    return full


def conv_bn(x, w, scale, shift, stride, padding, groups):
    """Direct (grouped) dense conv + BN on NHWC bf16 input; single pallas_call."""
    n, h, w_, cin = x.shape
    out_c, icg, KH, KW = w.shape
    sh, sw = stride
    ph, pw = padding
    if ph or pw:
        x = jnp.pad(x, ((0, 0), (ph, ph), (pw, pw), (0, 0)))
    hp, wp = h + 2 * ph, w_ + 2 * pw
    ho = (hp - KH) // sh + 1
    wo = (wp - KW) // sw + 1
    w_taps = _blockdiag_taps(w, groups).astype(jnp.bfloat16)   # (KH*KW, cin, out_c)
    kernel = functools.partial(_conv_bn_kernel, KH=KH, KW=KW, Ho=ho, Wo=wo,
                               sh=sh, sw=sw)
    return pl.pallas_call(
        kernel,
        out_shape=jax.ShapeDtypeStruct((n, ho, wo, out_c), jnp.bfloat16),
        grid=(n,),
        in_specs=[
            pl.BlockSpec((pl.Squeezed(), hp, wp, cin), lambda i: (i, 0, 0, 0)),
            pl.BlockSpec((KH * KW, cin, out_c), lambda i: (0, 0, 0)),
            pl.BlockSpec((1, out_c), lambda i: (0, 0)),
            pl.BlockSpec((1, out_c), lambda i: (0, 0)),
        ],
        out_specs=pl.BlockSpec((pl.Squeezed(), ho, wo, out_c),
                               lambda i: (i, 0, 0, 0)),
        compiler_params=pltpu.CompilerParams(dimension_semantics=("parallel",)),
    )(x.astype(jnp.bfloat16), w_taps,
      scale.reshape(1, out_c).astype(jnp.float32),
      shift.reshape(1, out_c).astype(jnp.float32))


# --------------------------------------------------------------------------
# Pallas kernel 3: depthwise conv (direct stride) + BN, bf16 in/out, f32 VPU
# --------------------------------------------------------------------------
def _dw_bn_kernel(x_ref, w_ref, s_ref, b_ref, o_ref, *, KH, KW, Ho, Wo, sh, sw):
    C = o_ref.shape[-1]

    def row_body(ho, carry):
        h0 = ho * sh                               # direct strided output row
        acc = jnp.zeros((1, Wo, C), jnp.float32)
        for kh in range(KH):
            for kw in range(KW):
                if sw == 1:
                    patch = x_ref[pl.ds(h0 + kh, 1), pl.ds(kw, Wo), :]
                else:
                    # strided width read: stride-2 layers do 1x the work
                    patch = x_ref[pl.ds(h0 + kh, 1), pl.ds(kw, Wo, stride=sw), :]
                acc = acc + patch.astype(jnp.float32) * w_ref[kh * KW + kw, :]
        y = acc * s_ref[0, :] + b_ref[0, :]
        o_ref[pl.ds(ho, 1), :, :] = y.astype(o_ref.dtype)
        return carry

    # full unroll only when the total tap count stays small (vreg pressure)
    unroll = True if Ho * KH * KW <= 96 else max(1, 96 // (KH * KW))
    lax.fori_loop(0, Ho, row_body, 0, unroll=unroll)


def dw_conv_bn(x, w_taps, scale, shift, KH, KW, stride, padding):
    """Depthwise KHxKW conv + BN on NHWC bf16 input, stride handled in-kernel."""
    n, h, w_, c = x.shape
    sh, sw = stride
    ph, pw = padding
    if ph or pw:
        x = jnp.pad(x, ((0, 0), (ph, ph), (pw, pw), (0, 0)))
    hp, wp = h + 2 * ph, w_ + 2 * pw
    ho = (hp - KH) // sh + 1
    wo = (wp - KW) // sw + 1
    kernel = functools.partial(_dw_bn_kernel, KH=KH, KW=KW, Ho=ho, Wo=wo,
                               sh=sh, sw=sw)
    return pl.pallas_call(
        kernel,
        out_shape=jax.ShapeDtypeStruct((n, ho, wo, c), jnp.bfloat16),
        grid=(n,),
        in_specs=[
            pl.BlockSpec((pl.Squeezed(), hp, wp, c), lambda i: (i, 0, 0, 0)),
            pl.BlockSpec((KH * KW, c), lambda i: (0, 0)),
            pl.BlockSpec((1, c), lambda i: (0, 0)),
            pl.BlockSpec((1, c), lambda i: (0, 0)),
        ],
        out_specs=pl.BlockSpec((pl.Squeezed(), ho, wo, c), lambda i: (i, 0, 0, 0)),
        compiler_params=pltpu.CompilerParams(dimension_semantics=("parallel",)),
    )(x.astype(jnp.bfloat16), w_taps.astype(jnp.float32),
      scale.reshape(1, c).astype(jnp.float32),
      shift.reshape(1, c).astype(jnp.float32))


# --------------------------------------------------------------------------
# Forward (glue: dtype cast + NHWC transpose + routing only)
# --------------------------------------------------------------------------
def linear_block_forward(p, x_nchw, *, stride=(1, 1), padding=(0, 0), groups=1):
    """Forward of Linear_block: y = BN(Conv2d(x)), eval-mode BN.  Returns bf16."""
    w = p["w"]
    out_c, icg, KH, KW = w.shape
    # cast BEFORE the transpose so all layout glue moves bf16, not f32
    x = jnp.transpose(x_nchw.astype(jnp.bfloat16), (0, 2, 3, 1))      # NHWC bf16
    in_c = x.shape[-1]
    if groups == in_c and out_c == in_c and icg == 1:                 # depthwise
        w_taps = w.reshape(out_c, KH * KW).T                          # (KH*KW, C)
        y = dw_conv_bn(x, w_taps, p["s"], p["b"], KH, KW, stride, padding)
    elif (KH, KW) == (1, 1) and stride == (1, 1) and padding == (0, 0) \
            and groups == 1:                                          # pointwise
        n, h, w_sp, cin = x.shape
        wmat = jnp.transpose(w[:, :, 0, 0], (1, 0))                   # (cin, out_c)
        y = matmul_bn(x.reshape(-1, cin), wmat, p["s"], p["b"])
        y = y.reshape(n, h, w_sp, out_c)
    else:                                                             # (grouped) KxK
        y = conv_bn(x, w, p["s"], p["b"], stride, padding, groups)
    return jnp.transpose(y, (0, 3, 1, 2))                             # NCHW bf16


# --------------------------------------------------------------------------
# Parameters (conv weight + folded eval-mode BN) and a pure-XLA reference
# --------------------------------------------------------------------------
def make_linear_block_params(key, in_c, out_c, kernel=(1, 1), groups=1):
    kh, kw = kernel
    k_w, k_g, k_b, k_m, k_v = jax.random.split(key, 5)
    fan_out = out_c * kh * kw                      # kaiming-normal, fan_out mode
    std = math.sqrt(2.0 / fan_out)
    w = std * jax.random.normal(k_w, (out_c, in_c // groups, kh, kw), jnp.float32)
    gamma = 1.0 + 0.1 * jax.random.normal(k_g, (out_c,), jnp.float32)
    beta = 0.1 * jax.random.normal(k_b, (out_c,), jnp.float32)
    mean = 0.1 * jax.random.normal(k_m, (out_c,), jnp.float32)
    var = 1.0 + 0.1 * jnp.abs(jax.random.normal(k_v, (out_c,), jnp.float32))
    scale = gamma / jnp.sqrt(var + BN_EPS)
    shift = beta - mean * scale
    return dict(w=w, s=scale, b=shift)


def linear_block_reference(p, x_nchw, *, stride, padding, groups):
    sh, sw = stride
    ph, pw = padding
    y = lax.conv_general_dilated(
        x_nchw.astype(jnp.float32), p["w"],
        window_strides=(sh, sw), padding=((ph, ph), (pw, pw)),
        dimension_numbers=("NCHW", "OIHW", "NCHW"),
        feature_group_count=groups, precision=lax.Precision.HIGHEST)
    return y * p["s"][None, :, None, None] + p["b"][None, :, None, None]


# --------------------------------------------------------------------------
if __name__ == "__main__":
    key = jax.random.PRNGKey(0)

    # (name, in_c, out_c, kernel, stride, padding, groups, x_shape[NCHW])
    cases = [
        ("pw_1x1_proj",  32, 64, (1, 1), (1, 1), (0, 0),  1, (2, 32, 16, 16)),
        ("conv_3x3_s2",   4, 32, (3, 3), (2, 2), (1, 1),  1, (2, 4, 16, 16)),
        ("grouped_3x3",   8,  8, (3, 3), (1, 1), (1, 1),  2, (2, 8, 16, 16)),
        ("dw_7x7_gdc",   64, 64, (7, 7), (1, 1), (0, 0), 64, (2, 64, 7, 7)),
        ("dw_3x3_s2",    64, 64, (3, 3), (2, 2), (1, 1), 64, (2, 64, 16, 16)),
    ]

    for name, in_c, out_c, ker, st, pad, g, xs in cases:
        key, kp, kx = jax.random.split(key, 3)
        params = make_linear_block_params(kp, in_c, out_c, ker, g)
        x = jax.random.normal(kx, xs, jnp.float32)
        fwd = jax.jit(functools.partial(linear_block_forward,
                                        stride=st, padding=pad, groups=g))
        y = jax.block_until_ready(fwd(params, x))
        y_ref = linear_block_reference(params, x, stride=st, padding=pad, groups=g)
        assert y.shape == y_ref.shape, (name, y.shape, y_ref.shape)
        y32 = y.astype(jnp.float32)
        assert bool(jnp.all(jnp.isfinite(y32))), name
        err = float(jnp.max(jnp.abs(y32 - y_ref)))
        tol = 3e-2 + 3e-2 * float(jnp.max(jnp.abs(y_ref)))   # bf16 in/out policy
        assert err < tol, (name, err, tol)

    print("KERNEL_OK")
</pallas_src>

<mosaic_0001>
module attributes {stable_mosaic.version = 11 : i64} {
  func.func @_matmul_bn_kernel(%arg0: i32, %arg1: memref<256x32xbf16, #tpu.memory_space<vmem>>, %arg2: memref<32x64xbf16, #tpu.memory_space<vmem>>, %arg3: memref<1x64xf32, #tpu.memory_space<vmem>>, %arg4: memref<1x64xf32, #tpu.memory_space<vmem>>, %arg5: memref<256x64xbf16, #tpu.memory_space<vmem>>) attributes {dimension_semantics = [#tpu.dimension_semantics<parallel>], iteration_bounds = array<i64: 2>, scalar_prefetch = 0 : i64, scratch_operands = 0 : i64, tpu.core_type = #tpu.core_type<tc>, window_params = [{transform_indices = @transform_0, window_bounds = array<i64: 256, 32>}, {pipeline_mode = #tpu.pipeline_mode<synchronous>, transform_indices = @transform_1, window_bounds = array<i64: 32, 64>}, {pipeline_mode = #tpu.pipeline_mode<synchronous>, transform_indices = @transform_2, window_bounds = array<i64: 1, 64>}, {pipeline_mode = #tpu.pipeline_mode<synchronous>, transform_indices = @transform_3, window_bounds = array<i64: 1, 64>}, {transform_indices = @transform_4, window_bounds = array<i64: 256, 64>}]} {
    %c0 = arith.constant 0 : index
    %c0_0 = arith.constant 0 : index
    %0 = vector.load %arg1[%c0, %c0_0] : memref<256x32xbf16, #tpu.memory_space<vmem>>, vector<256x32xbf16>
    %c0_1 = arith.constant 0 : index
    %c0_2 = arith.constant 0 : index
    %1 = vector.load %arg2[%c0_1, %c0_2] : memref<32x64xbf16, #tpu.memory_space<vmem>>, vector<32x64xbf16>
    %cst = arith.constant dense<0.000000e+00> : vector<256x64xf32>
    %2 = tpu.matmul %0, %1, %cst {dimension_numbers = #tpu.dot_dimension_numbers<[1], [0], [0], [1], [0, 0, 1, 1], [], []>} : vector<256x32xbf16>, vector<32x64xbf16>, vector<256x64xf32> -> vector<256x64xf32>
    %c0_3 = arith.constant 0 : index
    %c0_4 = arith.constant 0 : index
    %3 = vector.load %arg3[%c0_3, %c0_4] : memref<1x64xf32, #tpu.memory_space<vmem>>, vector<1x64xf32>
    %4 = vector.broadcast %3 : vector<1x64xf32> to vector<256x64xf32>
    %5 = arith.mulf %2, %4 : vector<256x64xf32>
    %c0_5 = arith.constant 0 : index
    %c0_6 = arith.constant 0 : index
    %6 = vector.load %arg4[%c0_5, %c0_6] : memref<1x64xf32, #tpu.memory_space<vmem>>, vector<1x64xf32>
    %7 = vector.broadcast %6 : vector<1x64xf32> to vector<256x64xf32>
    %8 = arith.addf %5, %7 : vector<256x64xf32>
    %9 = arith.truncf %8 : vector<256x64xf32> to vector<256x64xbf16>
    %c0_7 = arith.constant 0 : index
    %c0_8 = arith.constant 0 : index
    %10 = vector.load %arg5[%c0_7, %c0_8] : memref<256x64xbf16, #tpu.memory_space<vmem>>, vector<256x64xbf16>
    tpu.vector_store %arg5[%c0_7, %c0_8], %9 {strides = array<i32>} : memref<256x64xbf16, #tpu.memory_space<vmem>>, vector<256x64xbf16>,
    return
  }
  func.func @transform_0(%arg0: i32) -> (i32, i32) {
    %c0_i32 = arith.constant 0 : i32
    %c0_i32_0 = arith.constant 0 : i32
    return %arg0, %c0_i32 : i32, i32
  }
  func.func @transform_1(%arg0: i32) -> (i32, i32) {
    %c0_i32 = arith.constant 0 : i32
    %c0_i32_0 = arith.constant 0 : i32
    %c0_i32_1 = arith.constant 0 : i32
    return %c0_i32, %c0_i32_0 : i32, i32
  }
  func.func @transform_2(%arg0: i32) -> (i32, i32) {
    %c0_i32 = arith.constant 0 : i32
    %c0_i32_0 = arith.constant 0 : i32
    %c0_i32_1 = arith.constant 0 : i32
    return %c0_i32, %c0_i32_0 : i32, i32
  }
  func.func @transform_3(%arg0: i32) -> (i32, i32) {
    %c0_i32 = arith.constant 0 : i32
    %c0_i32_0 = arith.constant 0 : i32
    %c0_i32_1 = arith.constant 0 : i32
    return %c0_i32, %c0_i32_0 : i32, i32
  }
  func.func @transform_4(%arg0: i32) -> (i32, i32) {
    %c0_i32 = arith.constant 0 : i32
    %c0_i32_0 = arith.constant 0 : i32
    return %arg0, %c0_i32 : i32, i32
  }
}

</mosaic_0001>

<llo_original>
// kernel: linear_block_forward.1
$region0: #{linear_block_forward.1}
  #allocation0 [shape = 'u32[]', space=smem, size = 0x4, offset = 0x4, fixed_abs, tag = 'smem constant byte address 0x4 - core index']
  #allocation1 [shape = 'u32[144,128]{1,0:T(1,128)}', space=vmem, size = 0x12000, scoped, tag = 'internal scratch']
  %s0 = inlined_call_operand.vmem [shape: bf16[512,32], index: 0, kind: input, shape index: {}]
  %s1 = inlined_call_operand.vmem [shape: bf16[32,64], index: 1, kind: input, shape index: {}]
  %s2 = inlined_call_operand.vmem [shape: f32[1,64], index: 2, kind: input, shape index: {}]
  %s3 = inlined_call_operand.vmem [shape: f32[1,64], index: 3, kind: input, shape index: {}]
  %s4 = inlined_call_operand.hbm [shape: bf16[512,64], index: 4, kind: output, shape index: {}]
  %s5 = sld [smem:[#allocation0]]
  $region49: #{linear_block_forward.1} parent=0
    _
  %s7 = ssub.s32 1, %s5
  %s8 = scalar_select 0, %s7, %s5
  $region1: #{linear_block_forward.1} parent=0
    #allocation2 [shape = 'u8[131072]{0}', space=vmem, size = 0x20000, scoped, tag = 'output window, operand 0']
    #allocation3 [shape = 's32[2]{0}', space=sflag, size = 0x8, scoped, tag = 'scoped memory for linear_block_forward.1']
    %9 = vsyncpa [#allocation3], 0
    %s10 = scalar_lea.sflag [#allocation3], 1
    %11 = vsyncpa %s10, 0
    loop: start=0, step=1, limit=4
    $region2: #{linear_block_forward.1} parent=1 // loop_pre_header
      _
    $region3: #{linear_block_forward.1} parent=1 // loop_header
      %s13 = sphi 0, %s17
      %p14 = scmp.ge.s32.totalorder %s13, 4
      %s23 = sphi 0, %s25
      %s26 = sphi 0, %s23
      %s27 = sphi 0, %s26
      %s43 = sphi 0, %s27
      %s47 = sphi 0, %s47
      %s49 = sphi 0, %s47
      %s50 = sphi 0, %s49
      %s64 = sphi 0, %s50
      %s68 = sphi 0, %s68
      %s70 = sphi 0, %s68
      %s71 = sphi 0, %s70
      %s85 = sphi 0, %s71
      %s89 = sphi 0, %s89
      %s91 = sphi 0, %s89
      %s92 = sphi 0, %s91
      %s106 = sphi 0, %s92
      %s112 = sphi 0, %s114
      %s115 = sphi 0, %s112
      %s116 = sphi 0, %s115
      %s132 = sphi 0, %s116
    $region4: #{linear_block_forward.1} parent=1 // loop_header_branch
      %16 = sbr.rel (%p14) target = $region8
    $region5: #{linear_block_forward.1} parent=1 // loop_body
      %s18 = ssub.s32 %s13, 1
      %s19 = ssub.s32 %s13, 2
      %s20 = sadd.s32 %s13, 1
      %s21 = ssub.s32 %s13, %s20
      %p22 = scmp.eq.s32.totalorder %s21, 0
      %s24 = sadd.s32 %s23, 1
      %s25 = scalar_select %p22, %s23, %s24
      %p28 = pneg %p22
      %p29 = scmp.eq.s32.totalorder %s13, 1
      %p30 = por %p28, %p29
      %p31 = scmp.ne.s32.totalorder %s23, %s26
      %p32 = scmp.eq.s32.totalorder %s13, 0
      %p33 = por %p31, %p32
      %p34 = scmp.ne.s32.totalorder %s23, %s26
      %p35 = scmp.eq.s32.totalorder %s18, 1
      %p36 = por %p34, %p35
      %p37 = scmp.ne.s32.totalorder %s26, %s27
      %p38 = scmp.eq.s32.totalorder %s18, 0
      %p39 = por %p37, %p38
      %p40 = scmp.ne.s32.totalorder %s26, %s27
      %p41 = scmp.eq.s32.totalorder %s19, 1
      %p42 = por %p40, %p41
      %p44 = scmp.ne.s32.totalorder %s27, %s43
      %p45 = scmp.eq.s32.totalorder %s19, 0
      %p46 = por %p44, %p45
      %s48 = sadd.s32 %s47, 1
      %p51 = scmp.eq.s32.totalorder %s13, 1
      %p52 = scmp.ne.s32.totalorder %s47, %s49
      %p53 = scmp.eq.s32.totalorder %s13, 0
      %p54 = por %p52, %p53
      %p55 = scmp.ne.s32.totalorder %s47, %s49
      %p56 = scmp.eq.s32.totalorder %s18, 1
      %p57 = por %p55, %p56
      %p58 = scmp.ne.s32.totalorder %s49, %s50
      %p59 = scmp.eq.s32.totalorder %s18, 0
      %p60 = por %p58, %p59
      %p61 = scmp.ne.s32.totalorder %s49, %s50
      %p62 = scmp.eq.s32.totalorder %s19, 1
      %p63 = por %p61, %p62
      %p65 = scmp.ne.s32.totalorder %s50, %s64
      %p66 = scmp.eq.s32.totalorder %s19, 0
      %p67 = por %p65, %p66
      %s69 = sadd.s32 %s68, 1
      %p72 = scmp.eq.s32.totalorder %s13, 1
      %p73 = scmp.ne.s32.totalorder %s68, %s70
      %p74 = scmp.eq.s32.totalorder %s13, 0
      %p75 = por %p73, %p74
      %p76 = scmp.ne.s32.totalorder %s68, %s70
      %p77 = scmp.eq.s32.totalorder %s18, 1
      %p78 = por %p76, %p77
      %p79 = scmp.ne.s32.totalorder %s70, %s71
      %p80 = scmp.eq.s32.totalorder %s18, 0
      %p81 = por %p79, %p80
      %p82 = scmp.ne.s32.totalorder %s70, %s71
      %p83 = scmp.eq.s32.totalorder %s19, 1
      %p84 = por %p82, %p83
      %p86 = scmp.ne.s32.totalorder %s71, %s85
      %p87 = scmp.eq.s32.totalorder %s19, 0
      %p88 = por %p86, %p87
      %s90 = sadd.s32 %s89, 1
      %p93 = scmp.eq.s32.totalorder %s13, 1
      %p94 = scmp.ne.s32.totalorder %s89, %s91
      %p95 = scmp.eq.s32.totalorder %s13, 0
      %p96 = por %p94, %p95
      %p97 = scmp.ne.s32.totalorder %s89, %s91
      %p98 = scmp.eq.s32.totalorder %s18, 1
      %p99 = por %p97, %p98
      %p100 = scmp.ne.s32.totalorder %s91, %s92
      %p101 = scmp.eq.s32.totalorder %s18, 0
      %p102 = por %p100, %p101
      %p103 = scmp.ne.s32.totalorder %s91, %s92
      %p104 = scmp.eq.s32.totalorder %s19, 1
      %p105 = por %p103, %p104
      %p107 = scmp.ne.s32.totalorder %s92, %s106
      %p108 = scmp.eq.s32.totalorder %s19, 0
      %p109 = por %p107, %p108
      %s110 = ssub.s32 %s13, %s20
      %p111 = scmp.eq.s32.totalorder %s110, 0
      %s113 = sadd.s32 %s112, 1
      %s114 = scalar_select %p111, %s112, %s113
      %p117 = pneg %p111
      %p118 = scmp.eq.s32.totalorder %s13, 1
      %p119 = por %p117, %p118
      %p120 = scmp.ne.s32.totalorder %s112, %s115
      %p121 = scmp.eq.s32.totalorder %s13, 0
      %p122 = por %p120, %p121
      %p123 = scmp.ne.s32.totalorder %s112, %s115
      %p124 = scmp.eq.s32.totalorder %s18, 1
      %p125 = por %p123, %p124
      %p126 = scmp.ne.s32.totalorder %s115, %s116
      %p127 = scmp.eq.s32.totalorder %s18, 0
      %p128 = por %p126, %p127
      %p129 = scmp.ne.s32.totalorder %s115, %s116
      %p130 = scmp.eq.s32.totalorder %s19, 1
      %p131 = por %p129, %p130
      %p133 = scmp.ne.s32.totalorder %s116, %s132
      %p134 = scmp.eq.s32.totalorder %s19, 0
      %p135 = por %p133, %p134
      %p136 = scmp.le.s32.totalorder 1, %s13
      %p137 = scmp.lt.s32.totalorder %s13, 3
      %p138 = pnand %p136, %p137
      %p139 = pneg %p138
      // Predicated region
      $region9: #{linear_block_forward.1} parent=5 // pred_check
        _
      $region10: #{linear_block_forward.1} parent=5 // pred_check_branch
        %141 = sbr.rel (%p138) target = $region12
      $region11: #{linear_block_forward.1} parent=5 // pred_region
        %s142 = ssub.s32 %s13, 1
        // Predicated region
        $region13: #{linear_block_forward.1} parent=11 // pred_check
          %p143 = pneg %p60
        $region14: #{linear_block_forward.1} parent=11 // pred_check_branch
          %145 = sbr.rel (%p143) target = $region16
        $region15: #{linear_block_forward.1} parent=11 // pred_region
          _
        $region16: #{linear_block_forward.1} parent=11 // pred_fallthru
          _
        // Predicated region
        $region17: #{linear_block_forward.1} parent=11 // pred_check
          %p146 = pneg %p81
        $region18: #{linear_block_forward.1} parent=11 // pred_check_branch
          %148 = sbr.rel (%p146) target = $region20
        $region19: #{linear_block_forward.1} parent=11 // pred_region
          _
        $region20: #{linear_block_forward.1} parent=11 // pred_fallthru
          _
        // Predicated region
        $region21: #{linear_block_forward.1} parent=11 // pred_check
          %p149 = pneg %p102
        $region22: #{linear_block_forward.1} parent=11 // pred_check_branch
          %151 = sbr.rel (%p149) target = $region24
        $region23: #{linear_block_forward.1} parent=11 // pred_region
          _
        $region24: #{linear_block_forward.1} parent=11 // pred_fallthru
          _
      $region12: #{linear_block_forward.1} parent=5 // pred_fallthru
        _
      %p152 = scmp.lt.s32.totalorder %s13, 2
      // Predicated region
      $region25: #{linear_block_forward.1} parent=5 // pred_check
        %p153 = pneg %p152
      $region26: #{linear_block_forward.1} parent=5 // pred_check_branch
        %155 = sbr.rel (%p153) target = $region28
      $region27: #{linear_block_forward.1} parent=5 // pred_region
        // Predicated region
        $region29: #{linear_block_forward.1} parent=27 // pred_check
          %p156 = pneg %p33
        $region30: #{linear_block_forward.1} parent=27 // pred_check_branch
          %158 = sbr.rel (%p156) target = $region32
        $region31: #{linear_block_forward.1} parent=27 // pred_region
          %s159 = smul.u32 32, %s13
          %p160 = scmp.lt.s32.totalorder %s159, 63
          %s161 = scalar_select %p160, %s159, 63
          %s162 = smul.addr %s161, 4
          %s163 = scalar_lea.vmem %s0, %s162
          %s164 = smul.u32 32, %s13
        $region32: #{linear_block_forward.1} parent=27 // pred_fallthru
          _
      $region28: #{linear_block_forward.1} parent=5 // pred_fallthru
        _
      %p165 = scmp.le.s32.totalorder 1, %s13
      %p166 = scmp.lt.s32.totalorder %s13, 3
      %p167 = pnand %p165, %p166
      %p168 = pneg %p167
      // Predicated region
      $region33: #{linear_block_forward.1} parent=5 // pred_check
        _
      $region34: #{linear_block_forward.1} parent=5 // pred_check_branch
        %170 = sbr.rel (%p167) target = $region36
      $region35: #{linear_block_forward.1} parent=5 // pred_region
        %s171 = ssub.s32 %s13, 1
        %s172 = smul.u32 32, %s18
        %p173 = scmp.lt.s32.totalorder %s172, 63
        %s174 = scalar_select %p173, %s172, 63
        %s175 = smul.addr %s174, 4
        %s176 = scalar_lea.vmem %s0, %s175
        %p177 = pneg %p39
        %p178 = pneg %p36
        %p179 = pneg %p60
        %p180 = pneg %p57
        %p181 = pneg %p81
        %p182 = pneg %p78
        %p183 = pneg %p102
        %p184 = pneg %p99
        %p185 = pneg %p128
        %p186 = pneg %p125
        %s187 = sand.u32 %s115, 1
        %s188 = scalar_lea.sflag [#allocation3], %s187
        %s189 = sand.u32 %s115, 1
        %s190 = smul.addr %s189, 128
        %s191 = scalar_lea.vmem [#allocation2], %s190
        %s192 = smul.u32 32, %s18
        %p193 = scmp.lt.s32.totalorder %s192, 63
        %s194 = scalar_select %p193, %s192, 63
        %s195 = smul.addr %s194, 4
        %s196 = scalar_lea.vmem %s0, %s195
        %s197 = smul.u32 32, %s18
        %s198 = smul.u32 32, %s18
        %v200 = vld [vmem:[%s196] sm:$0xf]
        %v201 = vld [vmem:[%s196 + $0x4] sm:$0xf]
        %v202 = vld [vmem:[%s196 + $0x8] sm:$0xf]
        %v203 = vld [vmem:[%s196 + $0xc] sm:$0xf]
        %v204 = vld [vmem:[%s196 + $0x10] sm:$0xf]
        %v205 = vld [vmem:[%s196 + $0x14] sm:$0xf]
        %v206 = vld [vmem:[%s196 + $0x18] sm:$0xf]
        %v207 = vld [vmem:[%s196 + $0x1c] sm:$0xf]
        %v208 = vld [vmem:[%s196 + $0x20] sm:$0xf]
        %v209 = vld [vmem:[%s196 + $0x24] sm:$0xf]
        %v210 = vld [vmem:[%s196 + $0x28] sm:$0xf]
        %v211 = vld [vmem:[%s196 + $0x2c] sm:$0xf]
        %v212 = vld [vmem:[%s196 + $0x30] sm:$0xf]
        %v213 = vld [vmem:[%s196 + $0x34] sm:$0xf]
        %v214 = vld [vmem:[%s196 + $0x38] sm:$0xf]
        %v215 = vld [vmem:[%s196 + $0x3c] sm:$0xf]
        %v216 = vld [vmem:[%s196 + $0x40] sm:$0xf]
        %v217 = vld [vmem:[%s196 + $0x44] sm:$0xf]
        %v218 = vld [vmem:[%s196 + $0x48] sm:$0xf]
        %v219 = vld [vmem:[%s196 + $0x4c] sm:$0xf]
        %v220 = vld [vmem:[%s196 + $0x50] sm:$0xf]
        %v221 = vld [vmem:[%s196 + $0x54] sm:$0xf]
        %v222 = vld [vmem:[%s196 + $0x58] sm:$0xf]
        %v223 = vld [vmem:[%s196 + $0x5c] sm:$0xf]
        %v224 = vld [vmem:[%s196 + $0x60] sm:$0xf]
        %v225 = vld [vmem:[%s196 + $0x64] sm:$0xf]
        %v226 = vld [vmem:[%s196 + $0x68] sm:$0xf]
        %v227 = vld [vmem:[%s196 + $0x6c] sm:$0xf]
        %v228 = vld [vmem:[%s196 + $0x70] sm:$0xf]
        %v229 = vld [vmem:[%s196 + $0x74] sm:$0xf]
        %v230 = vld [vmem:[%s196 + $0x78] sm:$0xf]
        %v231 = vld [vmem:[%s196 + $0x7c] sm:$0xf]
        %v232 = vld [vmem:[%s1] sm:$0xf]
        %v233 = vld [vmem:[%s1 + $0x4] sm:$0xf]
        %v234 = vld [vmem:[%s1 + $0x8] sm:$0xf]
        %v235 = vld [vmem:[%s1 + $0xc] sm:$0xf]
        %v268 = vunpack.c.l.b16 %v200
        %v269 = vunpack.c.l.b16 %v201
        %v270 = vunpack.c.l.b16 %v202
        %v271 = vunpack.c.l.b16 %v203
        %v272 = vunpack.c.l.b16 %v204
        %v273 = vunpack.c.l.b16 %v205
        %v274 = vunpack.c.l.b16 %v206
        %v275 = vunpack.c.l.b16 %v207
        %v276 = vunpack.c.l.b16 %v208
        %v277 = vunpack.c.l.b16 %v209
        %v278 = vunpack.c.l.b16 %v210
        %v279 = vunpack.c.l.b16 %v211
        %v280 = vunpack.c.l.b16 %v212
        %v281 = vunpack.c.l.b16 %v213
        %v282 = vunpack.c.l.b16 %v214
        %v283 = vunpack.c.l.b16 %v215
        %v284 = vunpack.c.l.b16 %v216
        %v285 = vunpack.c.l.b16 %v217
        %v286 = vunpack.c.l.b16 %v218
        %v287 = vunpack.c.l.b16 %v219
        %v288 = vunpack.c.l.b16 %v220
        %v289 = vunpack.c.l.b16 %v221
        %v290 = vunpack.c.l.b16 %v222
        %v291 = vunpack.c.l.b16 %v223
        %v292 = vunpack.c.l.b16 %v224
        %v293 = vunpack.c.l.b16 %v225
        %v294 = vunpack.c.l.b16 %v226
        %v295 = vunpack.c.l.b16 %v227
        %v296 = vunpack.c.l.b16 %v228
        %v297 = vunpack.c.l.b16 %v229
        %v298 = vunpack.c.l.b16 %v230
        %v299 = vunpack.c.l.b16 %v231
        %v300 = vpack.c.b16 %v269, %v268
        %v301 = vpack.c.b16 %v271, %v270
        %v302 = vpack.c.b16 %v273, %v272
        %v303 = vpack.c.b16 %v275, %v274
        %v304 = vpack.c.b16 %v277, %v276
        %v305 = vpack.c.b16 %v279, %v278
        %v306 = vpack.c.b16 %v281, %v280
        %v307 = vpack.c.b16 %v283, %v282
        %v308 = vpack.c.b16 %v285, %v284
        %v309 = vpack.c.b16 %v287, %v286
        %v310 = vpack.c.b16 %v289, %v288
        %v311 = vpack.c.b16 %v291, %v290
        %v312 = vpack.c.b16 %v293, %v292
        %v313 = vpack.c.b16 %v295, %v294
        %v314 = vpack.c.b16 %v297, %v296
        %v315 = vpack.c.b16 %v299, %v298
        %v320 = vunpack.c.l.b16 %v232
        %v321 = vunpack.c.l.b16 %v233
        %v322 = vunpack.c.l.b16 %v234
        %v323 = vunpack.c.l.b16 %v235
        %v324 = vpack.c.b16 %v321, %v320
        %v325 = vpack.c.b16 %v323, %v322
        %vm328 = vcmask 261120
        %v330 = vsel %vm328, %v300, 0
        %v333 = vsel %vm328, %v301, 0
        %v336 = vsel %vm328, %v302, 0
        %v339 = vsel %vm328, %v303, 0
        %v342 = vsel %vm328, %v304, 0
        %v345 = vsel %vm328, %v305, 0
        %v348 = vsel %vm328, %v306, 0
        %v351 = vsel %vm328, %v307, 0
        %v354 = vsel %vm328, %v308, 0
        %v357 = vsel %vm328, %v309, 0
        %v360 = vsel %vm328, %v310, 0
        %v363 = vsel %vm328, %v311, 0
        %v366 = vsel %vm328, %v312, 0
        %v369 = vsel %vm328, %v313, 0
        %v372 = vsel %vm328, %v314, 0
        %v375 = vsel %vm328, %v315, 0
        %377 = vmatprep.subr.bf16.mxu0 0
        %378 = vmatpush1.bf16.msra.mxu0 %v324
        %379 = vmatprep.subr.bf16.mxu0 0
        %380 = vmatpush1.bf16.msra.mxu0 %v325
        %381 = vmatprep.subr.bf16.mxu0 0
        %382 = vmatpush1.bf16.msra.mxu0 0
        %383 = vmatprep.subr.bf16.mxu0 0
        %384 = vmatpush1.bf16.msra.mxu0 0
        %385 = vmatprep.subr.bf16.mxu0 0
        %386 = vmatpush1.bf16.msra.mxu0 0
        %387 = vmatprep.subr.bf16.mxu0 0
        %388 = vmatpush1.bf16.msra.mxu0 0
        %389 = vmatprep.subr.bf16.mxu0 0
        %390 = vmatpush1.bf16.msra.mxu0 0
        %391 = vmatprep.subr.bf16.mxu0 0
        %392 = vmatpush1.bf16.msra.mxu0 0
        %393 = vmatprep.subr.bf16.mxu0 0
        %394 = vmatpush1.bf16.msra.mxu0 0
        %395 = vmatprep.subr.bf16.mxu0 0
        %396 = vmatpush1.bf16.msra.mxu0 0
        %397 = vmatprep.subr.bf16.mxu0 0
        %398 = vmatpush1.bf16.msra.mxu0 0
        %399 = vmatprep.subr.bf16.mxu0 0
        %400 = vmatpush1.bf16.msra.mxu0 0
        %401 = vmatprep.subr.bf16.mxu0 0
        %402 = vmatpush1.bf16.msra.mxu0 0
        %403 = vmatprep.subr.bf16.mxu0 0
        %404 = vmatpush1.bf16.msra.mxu0 0
        %405 = vmatprep.subr.bf16.mxu0 0
        %406 = vmatpush1.bf16.msra.mxu0 0
        %407 = vmatprep.subr.bf16.mxu0 0
        %408 = vmatpush1.bf16.msra.mxu0 0
        %409 = vmatprep.mubr.bf16.mxu0 0
        %410 = vmatmul.mubr.bf16.gmra.mrb[0].mxu0 %v330
        %v411 = vpop.f32.mrb[0].mxu0
        %v412 = vadd.f32 0.0, %v411
        %v413 = vpop.f32.mrb[0].mxu0
        %v414 = vpop.f32.mrb[0].mxu0
        %v415 = vadd.f32 0.0, %v414
        %v416 = vpop.f32.mrb[0].mxu0
        %417 = vmatprep.mubr.bf16.mxu0 0
        %418 = vmatmul.mubr.bf16.gmra.mrb[0].mxu0 %v333
        %v419 = vpop.f32.mrb[0].mxu0
        %v420 = vadd.f32 0.0, %v419
        %v421 = vpop.f32.mrb[0].mxu0
        %v422 = vpop.f32.mrb[0].mxu0
        %v423 = vadd.f32 0.0, %v422
        %v424 = vpop.f32.mrb[0].mxu0
        %425 = vmatprep.mubr.bf16.mxu0 0
        %426 = vmatmul.mubr.bf16.gmra.mrb[0].mxu0 %v336
        %v427 = vpop.f32.mrb[0].mxu0
        %v428 = vadd.f32 0.0, %v427
        %v429 = vpop.f32.mrb[0].mxu0
        %v430 = vpop.f32.mrb[0].mxu0
        %v431 = vadd.f32 0.0, %v430
        %v432 = vpop.f32.mrb[0].mxu0
        %433 = vmatprep.mubr.bf16.mxu0 0
        %434 = vmatmul.mubr.bf16.gmra.mrb[0].mxu0 %v339
        %v435 = vpop.f32.mrb[0].mxu0
        %v436 = vadd.f32 0.0, %v435
        %v437 = vpop.f32.mrb[0].mxu0
        %v438 = vpop.f32.mrb[0].mxu0
        %v439 = vadd.f32 0.0, %v438
        %v440 = vpop.f32.mrb[0].mxu0
        %441 = vmatprep.mubr.bf16.mxu0 0
        %442 = vmatmul.mubr.bf16.gmra.mrb[0].mxu0 %v342
        %v443 = vpop.f32.mrb[0].mxu0
        %v444 = vadd.f32 0.0, %v443
        %v445 = vpop.f32.mrb[0].mxu0
        %v446 = vpop.f32.mrb[0].mxu0
        %v447 = vadd.f32 0.0, %v446
        %v448 = vpop.f32.mrb[0].mxu0
        %449 = vmatprep.mubr.bf16.mxu0 0
        %450 = vmatmul.mubr.bf16.gmra.mrb[0].mxu0 %v345
        %v451 = vpop.f32.mrb[0].mxu0
        %v452 = vadd.f32 0.0, %v451
        %v453 = vpop.f32.mrb[0].mxu0
        %v454 = vpop.f32.mrb[0].mxu0
        %v455 = vadd.f32 0.0, %v454
        %v456 = vpop.f32.mrb[0].mxu0
        %457 = vmatprep.mubr.bf16.mxu0 0
        %458 = vmatmul.mubr.bf16.gmra.mrb[0].mxu0 %v348
        %v459 = vpop.f32.mrb[0].mxu0
        %v460 = vadd.f32 0.0, %v459
        %v461 = vpop.f32.mrb[0].mxu0
        %v462 = vpop.f32.mrb[0].mxu0
        %v463 = vadd.f32 0.0, %v462
        %v464 = vpop.f32.mrb[0].mxu0
        %465 = vmatprep.mubr.bf16.mxu0 0
        %466 = vmatmul.mubr.bf16.gmra.mrb[0].mxu0 %v351
        %v467 = vpop.f32.mrb[0].mxu0
        %v468 = vadd.f32 0.0, %v467
        %v469 = vpop.f32.mrb[0].mxu0
        %v470 = vpop.f32.mrb[0].mxu0
        %v471 = vadd.f32 0.0, %v470
        %v472 = vpop.f32.mrb[0].mxu0
        %473 = vmatprep.mubr.bf16.mxu0 0
        %474 = vmatmul.mubr.bf16.gmra.mrb[0].mxu0 %v354
        %v475 = vpop.f32.mrb[0].mxu0
        %v476 = vadd.f32 0.0, %v475
        %v477 = vpop.f32.mrb[0].mxu0
        %v478 = vpop.f32.mrb[0].mxu0
        %v479 = vadd.f32 0.0, %v478
        %v480 = vpop.f32.mrb[0].mxu0
        %481 = vmatprep.mubr.bf16.mxu0 0
        %482 = vmatmul.mubr.bf16.gmra.mrb[0].mxu0 %v357
        %v483 = vpop.f32.mrb[0].mxu0
        %v484 = vadd.f32 0.0, %v483
        %v485 = vpop.f32.mrb[0].mxu0
        %v486 = vpop.f32.mrb[0].mxu0
        %v487 = vadd.f32 0.0, %v486
        %v488 = vpop.f32.mrb[0].mxu0
        %489 = vmatprep.mubr.bf16.mxu0 0
        %490 = vmatmul.mubr.bf16.gmra.mrb[0].mxu0 %v360
        %v491 = vpop.f32.mrb[0].mxu0
        %v492 = vadd.f32 0.0, %v491
        %v493 = vpop.f32.mrb[0].mxu0
        %v494 = vpop.f32.mrb[0].mxu0
        %v495 = vadd.f32 0.0, %v494
        %v496 = vpop.f32.mrb[0].mxu0
        %497 = vmatprep.mubr.bf16.mxu0 0
        %498 = vmatmul.mubr.bf16.gmra.mrb[0].mxu0 %v363
        %v499 = vpop.f32.mrb[0].mxu0
        %v500 = vadd.f32 0.0, %v499
        %v501 = vpop.f32.mrb[0].mxu0
        %v502 = vpop.f32.mrb[0].mxu0
        %v503 = vadd.f32 0.0, %v502
        %v504 = vpop.f32.mrb[0].mxu0
        %505 = vmatprep.mubr.bf16.mxu0 0
        %506 = vmatmul.mubr.bf16.gmra.mrb[0].mxu0 %v366
        %v507 = vpop.f32.mrb[0].mxu0
        %v508 = vadd.f32 0.0, %v507
        %v509 = vpop.f32.mrb[0].mxu0
        %v510 = vpop.f32.mrb[0].mxu0
        %v511 = vadd.f32 0.0, %v510
        %v512 = vpop.f32.mrb[0].mxu0
        %513 = vmatprep.mubr.bf16.mxu0 0
        %514 = vmatmul.mubr.bf16.gmra.mrb[0].mxu0 %v369
        %v515 = vpop.f32.mrb[0].mxu0
        %v516 = vadd.f32 0.0, %v515
        %v517 = vpop.f32.mrb[0].mxu0
        %v518 = vpop.f32.mrb[0].mxu0
        %v519 = vadd.f32 0.0, %v518
        %v520 = vpop.f32.mrb[0].mxu0
        %521 = vmatprep.mubr.bf16.mxu0 0
        %522 = vmatmul.mubr.bf16.gmra.mrb[0].mxu0 %v372
        %v523 = vpop.f32.mrb[0].mxu0
        %v524 = vadd.f32 0.0, %v523
        %v525 = vpop.f32.mrb[0].mxu0
        %v526 = vpop.f32.mrb[0].mxu0
        %v527 = vadd.f32 0.0, %v526
        %v528 = vpop.f32.mrb[0].mxu0
        %529 = vmatprep.mubr.bf16.mxu0 0
        %530 = vmatmul.mubr.bf16.gmra.mrb[0].mxu0 %v375
        %v531 = vpop.f32.mrb[0].mxu0
        %v532 = vadd.f32 0.0, %v531
        %v533 = vpop.f32.mrb[0].mxu0
        %v534 = vpop.f32.mrb[0].mxu0
        %v535 = vadd.f32 0.0, %v534
        %v536 = vpop.f32.mrb[0].mxu0
        %537 = vdwg.mxu0
        %v538 = vld [vmem:[%s2] sm:$0x1]
        %v540 = vlaneseq
        %v541 = vshrl.u32 %v540, 7
        %v542 = vsub.s32 0, %v541
        %v543 = vrot.slane %v538, %v542
        %v545 = vmul.f32 %v412, %v543
        %v546 = vmul.f32 %v415, %v543
        %v547 = vmul.f32 %v420, %v543
        %v548 = vmul.f32 %v423, %v543
        %v549 = vmul.f32 %v428, %v543
        %v550 = vmul.f32 %v431, %v543
        %v551 = vmul.f32 %v436, %v543
        %v552 = vmul.f32 %v439, %v543
        %v553 = vmul.f32 %v444, %v543
        %v554 = vmul.f32 %v447, %v543
        %v555 = vmul.f32 %v452, %v543
        %v556 = vmul.f32 %v455, %v543
        %v557 = vmul.f32 %v460, %v543
        %v558 = vmul.f32 %v463, %v543
        %v559 = vmul.f32 %v468, %v543
        %v560 = vmul.f32 %v471, %v543
        %v561 = vmul.f32 %v476, %v543
        %v562 = vmul.f32 %v479, %v543
        %v563 = vmul.f32 %v484, %v543
        %v564 = vmul.f32 %v487, %v543
        %v565 = vmul.f32 %v492, %v543
        %v566 = vmul.f32 %v495, %v543
        %v567 = vmul.f32 %v500, %v543
        %v568 = vmul.f32 %v503, %v543
        %v569 = vmul.f32 %v508, %v543
        %v570 = vmul.f32 %v511, %v543
        %v571 = vmul.f32 %v516, %v543
        %v572 = vmul.f32 %v519, %v543
        %v573 = vmul.f32 %v524, %v543
        %v574 = vmul.f32 %v527, %v543
        %v575 = vmul.f32 %v532, %v543
        %v576 = vmul.f32 %v535, %v543
        %v577 = vld [vmem:[%s3] sm:$0x1]
        %v579 = vlaneseq
        %v580 = vshrl.u32 %v579, 7
        %v581 = vsub.s32 0, %v580
        %v582 = vrot.slane %v577, %v581
        %v584 = vadd.f32 %v545, %v582
        %v585 = vadd.f32 %v546, %v582
        %v586 = vadd.f32 %v547, %v582
        %v587 = vadd.f32 %v548, %v582
        %v588 = vadd.f32 %v549, %v582
        %v589 = vadd.f32 %v550, %v582
        %v590 = vadd.f32 %v551, %v582
        %v591 = vadd.f32 %v552, %v582
        %v592 = vadd.f32 %v553, %v582
        %v593 = vadd.f32 %v554, %v582
        %v594 = vadd.f32 %v555, %v582
        %v595 = vadd.f32 %v556, %v582
        %v596 = vadd.f32 %v557, %v582
        %v597 = vadd.f32 %v558, %v582
        %v598 = vadd.f32 %v559, %v582
        %v599 = vadd.f32 %v560, %v582
        %v600 = vadd.f32 %v561, %v582
        %v601 = vadd.f32 %v562, %v582
        %v602 = vadd.f32 %v563, %v582
        %v603 = vadd.f32 %v564, %v582
        %v604 = vadd.f32 %v565, %v582
        %v605 = vadd.f32 %v566, %v582
        %v606 = vadd.f32 %v567, %v582
        %v607 = vadd.f32 %v568, %v582
        %v608 = vadd.f32 %v569, %v582
        %v609 = vadd.f32 %v570, %v582
        %v610 = vadd.f32 %v571, %v582
        %v611 = vadd.f32 %v572, %v582
        %v612 = vadd.f32 %v573, %v582
        %v613 = vadd.f32 %v574, %v582
        %v614 = vadd.f32 %v575, %v582
        %v615 = vadd.f32 %v576, %v582
        %v616 = vpack.c.bf16 %v585, %v584
        %v617 = vpack.c.bf16 %v587, %v586
        %v618 = vpack.c.bf16 %v589, %v588
        %v619 = vpack.c.bf16 %v591, %v590
        %v620 = vpack.c.bf16 %v593, %v592
        %v621 = vpack.c.bf16 %v595, %v594
        %v622 = vpack.c.bf16 %v597, %v596
        %v623 = vpack.c.bf16 %v599, %v598
        %v624 = vpack.c.bf16 %v601, %v600
        %v625 = vpack.c.bf16 %v603, %v602
        %v626 = vpack.c.bf16 %v605, %v604
        %v627 = vpack.c.bf16 %v607, %v606
        %v628 = vpack.c.bf16 %v609, %v608
        %v629 = vpack.c.bf16 %v611, %v610
        %v630 = vpack.c.bf16 %v613, %v612
        %v631 = vpack.c.bf16 %v615, %v614
        %v648 = vunpack.c.l.b16 %v616
        %v649 = vunpack.c.h.b16 %v616
        %v650 = vunpack.c.l.b16 %v617
        %v651 = vunpack.c.h.b16 %v617
        %v652 = vunpack.c.l.b16 %v618
        %v653 = vunpack.c.h.b16 %v618
        %v654 = vunpack.c.l.b16 %v619
        %v655 = vunpack.c.h.b16 %v619
        %v656 = vunpack.c.l.b16 %v620
        %v657 = vunpack.c.h.b16 %v620
        %v658 = vunpack.c.l.b16 %v621
        %v659 = vunpack.c.h.b16 %v621
        %v660 = vunpack.c.l.b16 %v622
        %v661 = vunpack.c.h.b16 %v622
        %v662 = vunpack.c.l.b16 %v623
        %v663 = vunpack.c.h.b16 %v623
        %v664 = vunpack.c.l.b16 %v624
        %v665 = vunpack.c.h.b16 %v624
        %v666 = vunpack.c.l.b16 %v625
        %v667 = vunpack.c.h.b16 %v625
        %v668 = vunpack.c.l.b16 %v626
        %v669 = vunpack.c.h.b16 %v626
        %v670 = vunpack.c.l.b16 %v627
        %v671 = vunpack.c.h.b16 %v627
        %v672 = vunpack.c.l.b16 %v628
        %v673 = vunpack.c.h.b16 %v628
        %v674 = vunpack.c.l.b16 %v629
        %v675 = vunpack.c.h.b16 %v629
        %v676 = vunpack.c.l.b16 %v630
        %v677 = vunpack.c.h.b16 %v630
        %v678 = vunpack.c.l.b16 %v631
        %v679 = vunpack.c.h.b16 %v631
        %v680 = vpack.c.b16 %v648, %v648
        %v681 = vpack.c.b16 %v649, %v649
        %v682 = vpack.c.b16 %v650, %v650
        %v683 = vpack.c.b16 %v651, %v651
        %v684 = vpack.c.b16 %v652, %v652
        %v685 = vpack.c.b16 %v653, %v653
        %v686 = vpack.c.b16 %v654, %v654
        %v687 = vpack.c.b16 %v655, %v655
        %v688 = vpack.c.b16 %v656, %v656
        %v689 = vpack.c.b16 %v657, %v657
        %v690 = vpack.c.b16 %v658, %v658
        %v691 = vpack.c.b16 %v659, %v659
        %v692 = vpack.c.b16 %v660, %v660
        %v693 = vpack.c.b16 %v661, %v661
        %v694 = vpack.c.b16 %v662, %v662
        %v695 = vpack.c.b16 %v663, %v663
        %v696 = vpack.c.b16 %v664, %v664
        %v697 = vpack.c.b16 %v665, %v665
        %v698 = vpack.c.b16 %v666, %v666
        %v699 = vpack.c.b16 %v667, %v667
        %v700 = vpack.c.b16 %v668, %v668
        %v701 = vpack.c.b16 %v669, %v669
        %v702 = vpack.c.b16 %v670, %v670
        %v703 = vpack.c.b16 %v671, %v671
        %v704 = vpack.c.b16 %v672, %v672
        %v705 = vpack.c.b16 %v673, %v673
        %v706 = vpack.c.b16 %v674, %v674
        %v707 = vpack.c.b16 %v675, %v675
        %v708 = vpack.c.b16 %v676, %v676
        %v709 = vpack.c.b16 %v677, %v677
        %v710 = vpack.c.b16 %v678, %v678
        %v711 = vpack.c.b16 %v679, %v679
        %vm744 = vcmask 519168
        %745 = vst.msk [vmem:[%s191] sm:$0xf] %vm744, %v680
        %746 = vst.msk [vmem:[%s191 + $0x4] sm:$0xf] %vm744, %v681
        %747 = vst.msk [vmem:[%s191 + $0x8] sm:$0xf] %vm744, %v682
        %748 = vst.msk [vmem:[%s191 + $0xc] sm:$0xf] %vm744, %v683
        %749 = vst.msk [vmem:[%s191 + $0x10] sm:$0xf] %vm744, %v684
        %750 = vst.msk [vmem:[%s191 + $0x14] sm:$0xf] %vm744, %v685
        %751 = vst.msk [vmem:[%s191 + $0x18] sm:$0xf] %vm744, %v686
        %752 = vst.msk [vmem:[%s191 + $0x1c] sm:$0xf] %vm744, %v687
        %753 = vst.msk [vmem:[%s191 + $0x20] sm:$0xf] %vm744, %v688
        %754 = vst.msk [vmem:[%s191 + $0x24] sm:$0xf] %vm744, %v689
        %755 = vst.msk [vmem:[%s191 + $0x28] sm:$0xf] %vm744, %v690
        %756 = vst.msk [vmem:[%s191 + $0x2c] sm:$0xf] %vm744, %v691
        %757 = vst.msk [vmem:[%s191 + $0x30] sm:$0xf] %vm744, %v692
        %758 = vst.msk [vmem:[%s191 + $0x34] sm:$0xf] %vm744, %v693
        %759 = vst.msk [vmem:[%s191 + $0x38] sm:$0xf] %vm744, %v694
        %760 = vst.msk [vmem:[%s191 + $0x3c] sm:$0xf] %vm744, %v695
        %761 = vst.msk [vmem:[%s191 + $0x40] sm:$0xf] %vm744, %v696
        %762 = vst.msk [vmem:[%s191 + $0x44] sm:$0xf] %vm744, %v697
        %763 = vst.msk [vmem:[%s191 + $0x48] sm:$0xf] %vm744, %v698
        %764 = vst.msk [vmem:[%s191 + $0x4c] sm:$0xf] %vm744, %v699
        %765 = vst.msk [vmem:[%s191 + $0x50] sm:$0xf] %vm744, %v700
        %766 = vst.msk [vmem:[%s191 + $0x54] sm:$0xf] %vm744, %v701
        %767 = vst.msk [vmem:[%s191 + $0x58] sm:$0xf] %vm744, %v702
        %768 = vst.msk [vmem:[%s191 + $0x5c] sm:$0xf] %vm744, %v703
        %769 = vst.msk [vmem:[%s191 + $0x60] sm:$0xf] %vm744, %v704
        %770 = vst.msk [vmem:[%s191 + $0x64] sm:$0xf] %vm744, %v705
        %771 = vst.msk [vmem:[%s191 + $0x68] sm:$0xf] %vm744, %v706
        %772 = vst.msk [vmem:[%s191 + $0x6c] sm:$0xf] %vm744, %v707
        %773 = vst.msk [vmem:[%s191 + $0x70] sm:$0xf] %vm744, %v708
        %774 = vst.msk [vmem:[%s191 + $0x74] sm:$0xf] %vm744, %v709
        %775 = vst.msk [vmem:[%s191 + $0x78] sm:$0xf] %vm744, %v710
        %776 = vst.msk [vmem:[%s191 + $0x7c] sm:$0xf] %vm744, %v711
        %s777 = sand.u32 %s115, 1
        %s778 = scalar_lea.sflag [#allocation3], %s777
        %s779 = sand.u32 %s115, 1
        %s780 = smul.addr %s779, 128
        %s781 = scalar_lea.vmem [#allocation2], %s780
        // Predicated region
        $region37: #{linear_block_forward.1} parent=35 // pred_check
          %p782 = pneg %p125
        $region38: #{linear_block_forward.1} parent=35 // pred_check_branch
          %784 = sbr.rel (%p782) target = $region40
        $region39: #{linear_block_forward.1} parent=35 // pred_region
          %s785 = smul.u32 32, %s18
          %s787 = ssub.s32 2048, 2048
          %788 = vsyncadd %s778, %s787
          %s789 = smul.addr %s785, 64
          %s790 = scalar_lea.hbm %s4, %s789
          %s791 = sshll.u32 %s781, 4
          %s792 = int_to_ptr.vmem [resolvable:$true] %s791
          %797 = dma.vmem_to_hbm [thread:$0]  %s792, 2048, %s790, %s778, 64, 64, 4
        $region40: #{linear_block_forward.1} parent=35 // pred_fallthru
          _
      $region36: #{linear_block_forward.1} parent=5 // pred_fallthru
        _
      %p798 = scmp.le.s32.totalorder 2, %s13
      // Predicated region
      $region41: #{linear_block_forward.1} parent=5 // pred_check
        %p799 = pneg %p798
      $region42: #{linear_block_forward.1} parent=5 // pred_check_branch
        %801 = sbr.rel (%p799) target = $region44
      $region43: #{linear_block_forward.1} parent=5 // pred_region
        %s802 = ssub.s32 %s13, 2
        // Predicated region
        $region45: #{linear_block_forward.1} parent=43 // pred_check
          %p803 = pneg %p131
        $region46: #{linear_block_forward.1} parent=43 // pred_check_branch
          %805 = sbr.rel (%p803) target = $region48
        $region47: #{linear_block_forward.1} parent=43 // pred_region
          %s806 = sand.u32 %s116, 1
          %s807 = scalar_lea.sflag [#allocation3], %s806
          %s808 = sand.u32 %s116, 1
          %s809 = smul.addr %s808, 128
          %s810 = scalar_lea.vmem [#allocation2], %s809
          %811 = dma.done %s807, 2048
        $region48: #{linear_block_forward.1} parent=43 // pred_fallthru
          _
      $region44: #{linear_block_forward.1} parent=5 // pred_fallthru
        _
    $region6: #{linear_block_forward.1} parent=1 // loop_footer
      %s17 = sadd.s32 1, %s13
    $region7: #{linear_block_forward.1} parent=1 // loop_footer_branch
      %12 = sbr.rel target = $region3
    $region8: #{linear_block_forward.1} parent=1 // loop_exit
      _
    %812 = vsyncpa [#allocation3], 1
    %s813 = scalar_lea.sflag [#allocation3], 1
    %814 = vsyncpa %s813, 1

</llo_original>
